<compile_context>
chip_gen: v5e
topology: v5e:2x2
jax: 0.10.0
libtpu: 0.0.40
codegen_flags: <defaults>
</compile_context>

<pallas_src>
import functools

import jax
import jax.numpy as jnp
from jax import lax
from jax.experimental import pallas as pl
from jax.experimental.pallas import tpu as pltpu

BN_EPS = 1e-5
LANE = 128
# Keep the scoped-VMEM request safely below v7x's 64 MiB physical VMEM
# (v5e/v6e have 128 MiB); leave headroom for compiler-internal scratch.
VMEM_CAP = 50 * 1024 * 1024
# Keep Y = X@W resident in VMEM during the aggregation while its
# double-buffered footprint stays below this budget; else stream it per K tile.
Y_RESIDENT_BUDGET = 16 * 1024 * 1024


def _round_up(x, m):
    return ((x + m - 1) // m) * m


def _largest_divisor_tile(n, candidates):
    for c in candidates:
        if c <= n and n % c == 0:
            return c
    return candidates[-1]


def _choose_tiles(n_pad):
    """Row tile tm (<=512, >=2 tiles when possible for v7x megacore) and
    A_hat reduction tile tk (as large as divides n_pad, capped at 2048)."""
    tk = _largest_divisor_tile(n_pad, (2048, 1024, 512, 256, 128))
    tm = 128
    for c in (512, 256, 128):
        if n_pad % c == 0 and (n_pad // c >= 2 or c == 128):
            tm = c
            break
    return tm, tk


def _vmem_limit(need_bytes):
    return int(min(need_bytes + (8 << 20), VMEM_CAP))


# ----------------------------------------------------------------------------
# Pallas kernels
# ----------------------------------------------------------------------------
def _xw_kernel(x_ref, w_ref, o_ref, acc_ref):
    """Row tile of X @ W, reduced over K tiles of the input feature width."""
    k = pl.program_id(1)

    @pl.when(k == 0)
    def _():
        acc_ref[...] = jnp.zeros_like(acc_ref)

    acc_ref[...] += jnp.dot(x_ref[...], w_ref[...],
                            preferred_element_type=jnp.float32)

    @pl.when(k == pl.num_programs(1) - 1)
    def _():
        o_ref[...] = acc_ref[...].astype(o_ref.dtype)


def _agg_kernel(a_ref, y_ref, s_ref, t_ref, o_ref, acc_ref, *, tk, y_resident):
    """Row tile of A_hat @ Y reduced over K tiles, with a fused
    scale/shift (bias + BatchNorm eval) + ReLU epilogue."""
    k = pl.program_id(1)

    @pl.when(k == 0)
    def _():
        acc_ref[...] = jnp.zeros_like(acc_ref)

    if y_resident:
        off = pl.multiple_of(k * tk, tk)
        y = y_ref[pl.ds(off, tk), :]          # VMEM-resident Y, sliced per K step
    else:
        y = y_ref[...]                        # streamed (tk, width) tile
    acc_ref[...] += jnp.dot(a_ref[...], y, preferred_element_type=jnp.float32)

    @pl.when(k == pl.num_programs(1) - 1)
    def _():
        h = acc_ref[...] * s_ref[...] + t_ref[...]
        o_ref[...] = jnp.maximum(h, 0.0).astype(o_ref.dtype)


def _decoder_kernel(src_ref, dst_ref, o_ref):
    """Inner-product decoder over a lane-dense (Dp, TE) edge block:
    bf16 elementwise product, f32 sublane reduce, sigmoid, (1, TE) store."""
    prod = (src_ref[...] * dst_ref[...]).astype(jnp.float32)
    s = jnp.sum(prod, axis=0, keepdims=True)
    o_ref[...] = jax.nn.sigmoid(s)


# ----------------------------------------------------------------------------
# Pallas wrappers
# ----------------------------------------------------------------------------
def _feature_matmul(x, w, tm, out_dtype):
    n_pad, f_pad = x.shape
    h_pad = w.shape[1]
    fk = _largest_divisor_tile(f_pad, (1024, 512, 256, 128))
    out_bytes = jnp.dtype(out_dtype).itemsize
    vmem_need = (2 * tm * fk * x.dtype.itemsize          # X tiles (double buffered)
                 + 2 * fk * h_pad * w.dtype.itemsize     # W tiles
                 + 2 * tm * h_pad * out_bytes            # output tiles
                 + tm * h_pad * 4)                       # accumulator
    return pl.pallas_call(
        _xw_kernel,
        out_shape=jax.ShapeDtypeStruct((n_pad, h_pad), out_dtype),
        grid=(n_pad // tm, f_pad // fk),
        in_specs=[pl.BlockSpec((tm, fk), lambda i, k: (i, k)),
                  pl.BlockSpec((fk, h_pad), lambda i, k: (k, 0))],
        out_specs=pl.BlockSpec((tm, h_pad), lambda i, k: (i, 0)),
        scratch_shapes=[pltpu.VMEM((tm, h_pad), jnp.float32)],
        compiler_params=pltpu.CompilerParams(
            dimension_semantics=("parallel", "arbitrary"),
            vmem_limit_bytes=_vmem_limit(vmem_need)),
        cost_estimate=pl.CostEstimate(
            flops=2 * n_pad * f_pad * h_pad,
            transcendentals=0,
            bytes_accessed=int(n_pad * f_pad * x.dtype.itemsize
                               + (n_pad // tm) * f_pad * h_pad * w.dtype.itemsize
                               + n_pad * h_pad * out_bytes)),
    )(x, w)


def _aggregate_bn_relu(a_hat, y, scale, shift, tm, tk, out_dtype):
    n_pad = a_hat.shape[0]
    width = y.shape[1]
    out_bytes = jnp.dtype(out_dtype).itemsize
    y_bytes = n_pad * width * y.dtype.itemsize
    y_resident = 2 * y_bytes <= Y_RESIDENT_BUDGET

    if y_resident:
        # Full-array block + constant index map: fetched from HBM once, then
        # resident in VMEM; the kernel slices the K tile with pl.ds.
        y_spec = pl.BlockSpec((n_pad, width), lambda i, k: (0, 0))
        y_traffic = y_bytes
        y_buf = 2 * y_bytes
    else:
        y_spec = pl.BlockSpec((tk, width), lambda i, k: (k, 0))
        y_traffic = (n_pad // tm) * y_bytes
        y_buf = 2 * tk * width * y.dtype.itemsize

    a_buf = 2 * tm * tk * a_hat.dtype.itemsize
    o_buf = 2 * tm * width * out_bytes
    acc_buf = tm * width * 4
    misc_buf = 4 * 2 * width * 4                       # scale/shift rows
    vmem_need = a_buf + y_buf + o_buf + acc_buf + misc_buf

    kernel = functools.partial(_agg_kernel, tk=tk, y_resident=y_resident)
    return pl.pallas_call(
        kernel,
        out_shape=jax.ShapeDtypeStruct((n_pad, width), out_dtype),
        grid=(n_pad // tm, n_pad // tk),
        in_specs=[
            pl.BlockSpec((tm, tk), lambda i, k: (i, k)),       # A_hat tile (streamed)
            y_spec,                                            # Y = X @ W
            pl.BlockSpec((1, width), lambda i, k: (0, 0)),     # folded scale
            pl.BlockSpec((1, width), lambda i, k: (0, 0)),     # folded shift
        ],
        out_specs=pl.BlockSpec((tm, width), lambda i, k: (i, 0)),
        scratch_shapes=[pltpu.VMEM((tm, width), jnp.float32)],
        compiler_params=pltpu.CompilerParams(
            dimension_semantics=("parallel", "arbitrary"),
            vmem_limit_bytes=_vmem_limit(vmem_need)),
        cost_estimate=pl.CostEstimate(
            flops=2 * n_pad * n_pad * width,
            transcendentals=0,
            bytes_accessed=int(n_pad * n_pad * a_hat.dtype.itemsize
                               + y_traffic
                               + n_pad * width * out_bytes
                               + 2 * width * 4)),
    )(a_hat, y, scale, shift)


def _decode_edges(src_t, dst_t, te):
    d_pad, e_pad = src_t.shape
    in_bytes = src_t.dtype.itemsize
    vmem_need = 2 * 2 * d_pad * te * in_bytes + 2 * te * 4
    return pl.pallas_call(
        _decoder_kernel,
        out_shape=jax.ShapeDtypeStruct((1, e_pad), jnp.float32),
        grid=(e_pad // te,),
        in_specs=[pl.BlockSpec((d_pad, te), lambda i: (0, i)),
                  pl.BlockSpec((d_pad, te), lambda i: (0, i))],
        out_specs=pl.BlockSpec((1, te), lambda i: (0, i)),
        compiler_params=pltpu.CompilerParams(
            dimension_semantics=("parallel",),
            vmem_limit_bytes=_vmem_limit(vmem_need)),
        cost_estimate=pl.CostEstimate(
            flops=2 * d_pad * e_pad,
            transcendentals=e_pad,
            bytes_accessed=int(2 * d_pad * e_pad * in_bytes + e_pad * 4)),
    )(src_t, dst_t)


# ----------------------------------------------------------------------------
# Glue (plain JAX): adjacency build, padding, BN folding, edge gather
# ----------------------------------------------------------------------------
def build_normalized_adjacency(edge_index, num_nodes, n_pad, dtype=jnp.bfloat16):
    """A_hat = D^{-1/2}(A + I)D^{-1/2}, matching PyG gcn_norm (source_to_target).
    TODO(synk): if the graph is static across calls, precompute A_hat once
    outside the jit; fp8 (v7x) / int8 (v5e, v6e) storage would halve the
    dominant HBM stream but is kept bf16 here for portability."""
    src, dst = edge_index[0], edge_index[1]
    a = jnp.zeros((num_nodes, num_nodes), jnp.float32)
    a = a.at[dst, src].add(1.0)                    # A[target, source]; dups sum
    # add_remaining_self_loops: only nodes without an existing self loop get one.
    idx = jnp.arange(num_nodes)
    diag = a[idx, idx]
    a = a.at[idx, idx].add(jnp.where(diag > 0.0, 0.0, 1.0))
    deg = jnp.sum(a, axis=1)                       # in-degree incl. self loops
    d = jnp.where(deg > 0.0, lax.rsqrt(deg), 0.0)
    a_hat = (a * d[:, None] * d[None, :]).astype(dtype)   # fused normalize+cast
    pad = n_pad - num_nodes
    return jnp.pad(a_hat, ((0, pad), (0, pad)))            # pad after the cast


def _pad2(m, r_pad, c_pad):
    return jnp.pad(m, ((0, r_pad - m.shape[0]), (0, c_pad - m.shape[1])))


def _pad_row(v, c_pad):
    return jnp.pad(v, (0, c_pad - v.shape[0])).reshape(1, -1)


def _fold_bias_bn(b, g, bt, mu, var, c_pad):
    """Fold GCN bias + BatchNorm(eval) into a single scale/shift pair.
    Padded (zero) channels get scale=shift=0 so they stay exactly zero."""
    s = g * lax.rsqrt(var + BN_EPS)
    t = (b - mu) * s + bt
    return (_pad_row(s, c_pad).astype(jnp.float32),
            _pad_row(t, c_pad).astype(jnp.float32))


def dominant_forward(x, edge_index, params):
    """DOMINANTModel.forward (eval mode) -> (embeddings [N, D], edge_probs [E])."""
    n, f_in = x.shape
    hidden = params["w1"].shape[1]
    emb = params["w2"].shape[1]

    n_pad = _round_up(n, LANE)
    tm, tk = _choose_tiles(n_pad)
    f_pad = _round_up(f_in, LANE)
    h_pad = _round_up(hidden, LANE)
    d_pad = _round_up(emb, LANE)

    a_hat = build_normalized_adjacency(edge_index, n, n_pad)        # [Np, Np] bf16
    x_pad = _pad2(x, n_pad, f_pad).astype(jnp.bfloat16)

    w1 = _pad2(params["w1"], f_pad, h_pad).astype(jnp.bfloat16)
    w2 = _pad2(params["w2"], h_pad, d_pad).astype(jnp.bfloat16)
    s1, t1 = _fold_bias_bn(params["b1"], params["g1"], params["bt1"],
                           params["mu1"], params["var1"], h_pad)
    s2, t2 = _fold_bias_bn(params["b2"], params["g2"], params["bt2"],
                           params["mu2"], params["var2"], d_pad)

    # ---- GCN layer 1: ReLU(BN(A_hat @ (X @ W1) + b1)) ----
    xw1 = _feature_matmul(x_pad, w1, tm, jnp.bfloat16)              # [Np, Hp] bf16
    h1 = _aggregate_bn_relu(a_hat, xw1, s1, t1, tm, tk, jnp.bfloat16)
    # TODO(synk): Dropout is identity (eval mode); training-mode RNG masks not reproduced.

    # ---- GCN layer 2: ReLU(BN(A_hat @ (h1 @ W2) + b2)) ----
    hw2 = _feature_matmul(h1, w2, tm, jnp.bfloat16)                 # [Np, Dp] bf16
    emb_pad = _aggregate_bn_relu(a_hat, hw2, s2, t2, tm, tk, jnp.float32)

    embeddings = emb_pad[:n, :emb]                                   # [N, D] f32

    # ---- inner-product decoder (blocked over edges, lane-dense bf16 blocks) ----
    row, col = edge_index[0], edge_index[1]
    e = row.shape[0]
    te = 512 if e >= 512 else LANE
    e_pad = _round_up(e, te)
    # One transpose of the small [Np, Dp] embedding matrix, then gather the edge
    # endpoints directly into the lane-dense [Dp, E] layout in bf16.
    emb_t = emb_pad.astype(jnp.bfloat16).T                           # [Dp, Np]
    src_t = jnp.pad(emb_t[:, row], ((0, 0), (0, e_pad - e)))         # [Dp, Ep]
    dst_t = jnp.pad(emb_t[:, col], ((0, 0), (0, e_pad - e)))
    edge_probs = _decode_edges(src_t, dst_t, te)[0, :e]              # [E] f32

    return embeddings, edge_probs


def init_params(key, input_dim, hidden_dim, embedding_dim):
    k1, k2, k3, k4, k5, k6 = jax.random.split(key, 6)
    return {
        # GCNConv 1
        "w1": jax.random.normal(k1, (input_dim, hidden_dim), jnp.float32) * 0.1,
        "b1": jax.random.normal(k3, (hidden_dim,), jnp.float32) * 0.01,
        # BatchNorm1d(hidden_dim), eval mode (running stats)
        "g1": jnp.ones((hidden_dim,), jnp.float32),
        "bt1": jnp.zeros((hidden_dim,), jnp.float32),
        "mu1": jax.random.normal(k5, (hidden_dim,), jnp.float32) * 0.05,
        "var1": jnp.ones((hidden_dim,), jnp.float32),
        # GCNConv 2
        "w2": jax.random.normal(k2, (hidden_dim, embedding_dim), jnp.float32) * 0.1,
        "b2": jax.random.normal(k4, (embedding_dim,), jnp.float32) * 0.01,
        # BatchNorm1d(embedding_dim), eval mode
        "g2": jnp.ones((embedding_dim,), jnp.float32),
        "bt2": jnp.zeros((embedding_dim,), jnp.float32),
        "mu2": jax.random.normal(k6, (embedding_dim,), jnp.float32) * 0.05,
        "var2": jnp.ones((embedding_dim,), jnp.float32),
    }


if __name__ == "__main__":
    N, F_IN, HIDDEN, EMB, E = 32, 16, 64, 32, 48

    key = jax.random.PRNGKey(0)
    kx, ke, kp = jax.random.split(key, 3)

    x = jax.random.normal(kx, (N, F_IN), jnp.float32)
    edge_index = jax.random.randint(ke, (2, E), 0, N, dtype=jnp.int32)
    params = init_params(kp, F_IN, HIDDEN, EMB)

    embeddings, edge_probs = dominant_forward(x, edge_index, params)
    jax.block_until_ready((embeddings, edge_probs))

    assert embeddings.shape == (N, EMB)
    assert edge_probs.shape == (E,)
    assert bool(jnp.all(jnp.isfinite(embeddings)))
    assert bool(jnp.all((edge_probs >= 0.0) & (edge_probs <= 1.0)))
    print("KERNEL_OK")
</pallas_src>

<mosaic_0001>
module attributes {stable_mosaic.version = 11 : i64} {
  func.func @_xw_kernel(%arg0: i32, %arg1: i32, %arg2: memref<128x128xbf16, #tpu.memory_space<vmem>>, %arg3: memref<128x128xbf16, #tpu.memory_space<vmem>>, %arg4: memref<128x128xbf16, #tpu.memory_space<vmem>>, %arg5: memref<128x128xf32, #tpu.memory_space<vmem>>) attributes {dimension_semantics = [#tpu.dimension_semantics<parallel>, #tpu.dimension_semantics<arbitrary>], iteration_bounds = array<i64: 1, 1>, scalar_prefetch = 0 : i64, scratch_operands = 1 : i64, tpu.core_type = #tpu.core_type<tc>, window_params = [{transform_indices = @transform_0, window_bounds = array<i64: 128, 128>}, {transform_indices = @transform_1, window_bounds = array<i64: 128, 128>}, {transform_indices = @transform_2, window_bounds = array<i64: 128, 128>}]} {
    %c0_i32 = arith.constant 0 : i32
    %0 = arith.cmpi eq, %arg1, %c0_i32 : i32
    %1 = arith.extui %0 : i1 to i32
    %c0_i32_0 = arith.constant 0 : i32
    %2 = arith.cmpi ne, %1, %c0_i32_0 : i32
    scf.if %2 {
      %cst_10 = arith.constant 0.000000e+00 : f32
      %12 = vector.broadcast %cst_10 : f32 to vector<128x128xf32>
      %c0_11 = arith.constant 0 : index
      %c0_12 = arith.constant 0 : index
      %13 = vector.load %arg5[%c0_11, %c0_12] : memref<128x128xf32, #tpu.memory_space<vmem>>, vector<128x128xf32>
      tpu.vector_store %arg5[%c0_11, %c0_12], %12 {strides = array<i32>} : memref<128x128xf32, #tpu.memory_space<vmem>>, vector<128x128xf32>,
    } else {
    }
    %c0 = arith.constant 0 : index
    %c0_1 = arith.constant 0 : index
    %3 = vector.load %arg5[%c0, %c0_1] : memref<128x128xf32, #tpu.memory_space<vmem>>, vector<128x128xf32>
    %c0_2 = arith.constant 0 : index
    %c0_3 = arith.constant 0 : index
    %4 = vector.load %arg2[%c0_2, %c0_3] : memref<128x128xbf16, #tpu.memory_space<vmem>>, vector<128x128xbf16>
    %c0_4 = arith.constant 0 : index
    %c0_5 = arith.constant 0 : index
    %5 = vector.load %arg3[%c0_4, %c0_5] : memref<128x128xbf16, #tpu.memory_space<vmem>>, vector<128x128xbf16>
    %cst = arith.constant dense<0.000000e+00> : vector<128x128xf32>
    %6 = tpu.matmul %4, %5, %cst {dimension_numbers = #tpu.dot_dimension_numbers<[1], [0], [0], [1], [0, 0, 1, 1], [], []>} : vector<128x128xbf16>, vector<128x128xbf16>, vector<128x128xf32> -> vector<128x128xf32>
    %7 = arith.addf %3, %6 : vector<128x128xf32>
    %c0_6 = arith.constant 0 : index
    %c0_7 = arith.constant 0 : index
    %8 = vector.load %arg5[%c0_6, %c0_7] : memref<128x128xf32, #tpu.memory_space<vmem>>, vector<128x128xf32>
    tpu.vector_store %arg5[%c0_6, %c0_7], %7 {strides = array<i32>} : memref<128x128xf32, #tpu.memory_space<vmem>>, vector<128x128xf32>,
    %c0_i32_8 = arith.constant 0 : i32
    %9 = arith.cmpi eq, %arg1, %c0_i32_8 : i32
    %10 = arith.extui %9 : i1 to i32
    %c0_i32_9 = arith.constant 0 : i32
    %11 = arith.cmpi ne, %10, %c0_i32_9 : i32
    scf.if %11 {
      %c0_10 = arith.constant 0 : index
      %c0_11 = arith.constant 0 : index
      %12 = vector.load %arg5[%c0_10, %c0_11] : memref<128x128xf32, #tpu.memory_space<vmem>>, vector<128x128xf32>
      %13 = arith.truncf %12 : vector<128x128xf32> to vector<128x128xbf16>
      %c0_12 = arith.constant 0 : index
      %c0_13 = arith.constant 0 : index
      %14 = vector.load %arg4[%c0_12, %c0_13] : memref<128x128xbf16, #tpu.memory_space<vmem>>, vector<128x128xbf16>
      tpu.vector_store %arg4[%c0_12, %c0_13], %13 {strides = array<i32>} : memref<128x128xbf16, #tpu.memory_space<vmem>>, vector<128x128xbf16>,
    } else {
    }
    return
  }
  func.func @transform_0(%arg0: i32, %arg1: i32) -> (i32, i32) {
    %c0_i32 = arith.constant 0 : i32
    return %arg0, %arg1 : i32, i32
  }
  func.func @transform_1(%arg0: i32, %arg1: i32) -> (i32, i32) {
    %c0_i32 = arith.constant 0 : i32
    %c0_i32_0 = arith.constant 0 : i32
    return %arg1, %c0_i32 : i32, i32
  }
  func.func @transform_2(%arg0: i32, %arg1: i32) -> (i32, i32) {
    %c0_i32 = arith.constant 0 : i32
    %c0_i32_0 = arith.constant 0 : i32
    return %arg0, %c0_i32 : i32, i32
  }
}

</mosaic_0001>

<llo_original>
// kernel: tpu_custom_call.1
$region0: #{tpu_custom_call.1}
  #allocation0 [shape = 'u32[]', space=smem, size = 0x4, offset = 0x4, fixed_abs, tag = 'smem constant byte address 0x4 - core index']
  #allocation1 [shape = 'u32[72,128]{1,0:T(1,128)}', space=vmem, size = 0x9000, scoped, tag = 'internal scratch']
  #allocation2 [shape = 'f32[128,128]{1,0:T(8,128)}', space=vmem, size = 0x10000, scoped, tag = 'scratch operand']
  %s0 = inlined_call_operand.hbm [shape: bf16[128,128], index: 0, kind: input, shape index: {}]
  %s1 = inlined_call_operand.hbm [shape: bf16[128,128], index: 1, kind: input, shape index: {}]
  %s2 = inlined_call_operand.hbm [shape: bf16[128,128], index: 2, kind: output, shape index: {}]
  %s3 = sld [smem:[#allocation0]]
  $region34: #{tpu_custom_call.1} parent=0
    _
  %s5 = ssub.s32 1, %s3
  %s6 = scalar_select 0, %s5, %s3
  $region1: #{tpu_custom_call.1} parent=0
    #allocation3 [shape = 'u8[32768]{0}', space=vmem, size = 0x8000, scoped, tag = 'input window, operand 0, single buffered']
    #allocation4 [shape = 's32[1]{0}', space=sflag, size = 0x4, scoped, tag = 'scoped memory for tpu_custom_call.1']
    #allocation5 [shape = 's32[1]{0}', space=sflag, size = 0x4, scoped, tag = 'scoped memory for tpu_custom_call.1']
    #allocation6 [shape = 'u8[32768]{0}', space=vmem, size = 0x8000, scoped, tag = 'input window, operand 1, single buffered']
    #allocation7 [shape = 's32[1]{0}', space=sflag, size = 0x4, scoped, tag = 'scoped memory for tpu_custom_call.1']
    #allocation8 [shape = 'u8[32768]{0}', space=vmem, size = 0x8000, scoped, tag = 'output window, operand 0, single buffered']
    %7 = vsyncpa [#allocation4], 0
    %8 = vsyncpa [#allocation7], 0
    %9 = vsyncpa [#allocation5], 0
    // Predicated region
    $region2: #{tpu_custom_call.1} parent=1 // pred_check
      _
    $region3: #{tpu_custom_call.1} parent=1 // pred_check_branch
      %11 = sbr.rel (0) target = $region5
    $region4: #{tpu_custom_call.1} parent=1 // pred_region
      %13 = vsyncadd [#allocation4], 0
      %s14 = sshll.u32 %s0, 4
      %s15 = int_to_ptr.hbm [resolvable:$true] %s14
      %s16 = sshll.u32 [#allocation3], 4
      %s17 = int_to_ptr.vmem [resolvable:$true] %s16
      %22 = dma.hbm_to_vmem [thread:$0]  %s15, 1024, %s17, [#allocation4], 64, 64, 4
    $region5: #{tpu_custom_call.1} parent=1 // pred_fallthru
      _
    // Predicated region
    $region6: #{tpu_custom_call.1} parent=1 // pred_check
      _
    $region7: #{tpu_custom_call.1} parent=1 // pred_check_branch
      %24 = sbr.rel (0) target = $region9
    $region8: #{tpu_custom_call.1} parent=1 // pred_region
      %26 = vsyncadd [#allocation7], 0
      %s27 = sshll.u32 %s1, 4
      %s28 = int_to_ptr.hbm [resolvable:$true] %s27
      %s29 = sshll.u32 [#allocation6], 4
      %s30 = int_to_ptr.vmem [resolvable:$true] %s29
      %35 = dma.hbm_to_vmem [thread:$0]  %s28, 1024, %s30, [#allocation7], 64, 64, 4
    $region9: #{tpu_custom_call.1} parent=1 // pred_fallthru
      _
    // Predicated region
    $region10: #{tpu_custom_call.1} parent=1 // pred_check
      _
    $region11: #{tpu_custom_call.1} parent=1 // pred_check_branch
      %37 = sbr.rel (0) target = $region13
    $region12: #{tpu_custom_call.1} parent=1 // pred_region
      %39 = dma.done [#allocation4], 1024
    $region13: #{tpu_custom_call.1} parent=1 // pred_fallthru
      _
    // Predicated region
    $region14: #{tpu_custom_call.1} parent=1 // pred_check
      _
    $region15: #{tpu_custom_call.1} parent=1 // pred_check_branch
      %41 = sbr.rel (0) target = $region17
    $region16: #{tpu_custom_call.1} parent=1 // pred_region
      %43 = dma.done [#allocation7], 1024
    $region17: #{tpu_custom_call.1} parent=1 // pred_fallthru
      _
    %p44 = scmp.eq.s32.totalorder 0, 0
    // Predicated region
    $region18: #{tpu_custom_call.1} parent=1 // pred_check
      %p45 = pneg %p44
    $region19: #{tpu_custom_call.1} parent=1 // pred_check_branch
      %47 = sbr.rel (%p45) target = $region21
    $region20: #{tpu_custom_call.1} parent=1 // pred_region
      %48 = vst [vmem:[#allocation2] sm:$0xff] 0.0
      %49 = vst [vmem:[#allocation2 + $0x8] sm:$0xff] 0.0
      %50 = vst [vmem:[#allocation2 + $0x10] sm:$0xff] 0.0
      %51 = vst [vmem:[#allocation2 + $0x18] sm:$0xff] 0.0
      %52 = vst [vmem:[#allocation2 + $0x20] sm:$0xff] 0.0
      %53 = vst [vmem:[#allocation2 + $0x28] sm:$0xff] 0.0
      %54 = vst [vmem:[#allocation2 + $0x30] sm:$0xff] 0.0
      %55 = vst [vmem:[#allocation2 + $0x38] sm:$0xff] 0.0
      %56 = vst [vmem:[#allocation2 + $0x40] sm:$0xff] 0.0
      %57 = vst [vmem:[#allocation2 + $0x48] sm:$0xff] 0.0
      %58 = vst [vmem:[#allocation2 + $0x50] sm:$0xff] 0.0
      %59 = vst [vmem:[#allocation2 + $0x58] sm:$0xff] 0.0
      %60 = vst [vmem:[#allocation2 + $0x60] sm:$0xff] 0.0
      %61 = vst [vmem:[#allocation2 + $0x68] sm:$0xff] 0.0
      %62 = vst [vmem:[#allocation2 + $0x70] sm:$0xff] 0.0
      %63 = vst [vmem:[#allocation2 + $0x78] sm:$0xff] 0.0
    $region21: #{tpu_custom_call.1} parent=1 // pred_fallthru
      _
    %v64 = vld [vmem:[#allocation2] sm:$0xff]
    %v65 = vld [vmem:[#allocation2 + $0x8] sm:$0xff]
    %v66 = vld [vmem:[#allocation2 + $0x10] sm:$0xff]
    %v67 = vld [vmem:[#allocation2 + $0x18] sm:$0xff]
    %v68 = vld [vmem:[#allocation2 + $0x20] sm:$0xff]
    %v69 = vld [vmem:[#allocation2 + $0x28] sm:$0xff]
    %v70 = vld [vmem:[#allocation2 + $0x30] sm:$0xff]
    %v71 = vld [vmem:[#allocation2 + $0x38] sm:$0xff]
    %v72 = vld [vmem:[#allocation2 + $0x40] sm:$0xff]
    %v73 = vld [vmem:[#allocation2 + $0x48] sm:$0xff]
    %v74 = vld [vmem:[#allocation2 + $0x50] sm:$0xff]
    %v75 = vld [vmem:[#allocation2 + $0x58] sm:$0xff]
    %v76 = vld [vmem:[#allocation2 + $0x60] sm:$0xff]
    %v77 = vld [vmem:[#allocation2 + $0x68] sm:$0xff]
    %v78 = vld [vmem:[#allocation2 + $0x70] sm:$0xff]
    %v79 = vld [vmem:[#allocation2 + $0x78] sm:$0xff]
    %v80 = vld [vmem:[#allocation3] sm:$0xf]
    %v81 = vld [vmem:[#allocation3 + $0x4] sm:$0xf]
    %v82 = vld [vmem:[#allocation3 + $0x8] sm:$0xf]
    %v83 = vld [vmem:[#allocation3 + $0xc] sm:$0xf]
    %v84 = vld [vmem:[#allocation3 + $0x10] sm:$0xf]
    %v85 = vld [vmem:[#allocation3 + $0x14] sm:$0xf]
    %v86 = vld [vmem:[#allocation3 + $0x18] sm:$0xf]
    %v87 = vld [vmem:[#allocation3 + $0x1c] sm:$0xf]
    %v88 = vld [vmem:[#allocation3 + $0x20] sm:$0xf]
    %v89 = vld [vmem:[#allocation3 + $0x24] sm:$0xf]
    %v90 = vld [vmem:[#allocation3 + $0x28] sm:$0xf]
    %v91 = vld [vmem:[#allocation3 + $0x2c] sm:$0xf]
    %v92 = vld [vmem:[#allocation3 + $0x30] sm:$0xf]
    %v93 = vld [vmem:[#allocation3 + $0x34] sm:$0xf]
    %v94 = vld [vmem:[#allocation3 + $0x38] sm:$0xf]
    %v95 = vld [vmem:[#allocation3 + $0x3c] sm:$0xf]
    %v96 = vld [vmem:[#allocation6] sm:$0xf]
    %v97 = vld [vmem:[#allocation6 + $0x4] sm:$0xf]
    %v98 = vld [vmem:[#allocation6 + $0x8] sm:$0xf]
    %v99 = vld [vmem:[#allocation6 + $0xc] sm:$0xf]
    %v100 = vld [vmem:[#allocation6 + $0x10] sm:$0xf]
    %v101 = vld [vmem:[#allocation6 + $0x14] sm:$0xf]
    %v102 = vld [vmem:[#allocation6 + $0x18] sm:$0xf]
    %v103 = vld [vmem:[#allocation6 + $0x1c] sm:$0xf]
    %v104 = vld [vmem:[#allocation6 + $0x20] sm:$0xf]
    %v105 = vld [vmem:[#allocation6 + $0x24] sm:$0xf]
    %v106 = vld [vmem:[#allocation6 + $0x28] sm:$0xf]
    %v107 = vld [vmem:[#allocation6 + $0x2c] sm:$0xf]
    %v108 = vld [vmem:[#allocation6 + $0x30] sm:$0xf]
    %v109 = vld [vmem:[#allocation6 + $0x34] sm:$0xf]
    %v110 = vld [vmem:[#allocation6 + $0x38] sm:$0xf]
    %v111 = vld [vmem:[#allocation6 + $0x3c] sm:$0xf]
    %v128 = vunpack.c.l.b16 %v80
    %v129 = vunpack.c.l.b16 %v81
    %v130 = vunpack.c.l.b16 %v82
    %v131 = vunpack.c.l.b16 %v83
    %v132 = vunpack.c.l.b16 %v84
    %v133 = vunpack.c.l.b16 %v85
    %v134 = vunpack.c.l.b16 %v86
    %v135 = vunpack.c.l.b16 %v87
    %v136 = vunpack.c.l.b16 %v88
    %v137 = vunpack.c.l.b16 %v89
    %v138 = vunpack.c.l.b16 %v90
    %v139 = vunpack.c.l.b16 %v91
    %v140 = vunpack.c.l.b16 %v92
    %v141 = vunpack.c.l.b16 %v93
    %v142 = vunpack.c.l.b16 %v94
    %v143 = vunpack.c.l.b16 %v95
    %v144 = vpack.c.b16 %v129, %v128
    %v145 = vpack.c.b16 %v131, %v130
    %v146 = vpack.c.b16 %v133, %v132
    %v147 = vpack.c.b16 %v135, %v134
    %v148 = vpack.c.b16 %v137, %v136
    %v149 = vpack.c.b16 %v139, %v138
    %v150 = vpack.c.b16 %v141, %v140
    %v151 = vpack.c.b16 %v143, %v142
    %v176 = vunpack.c.l.b16 %v96
    %v177 = vunpack.c.l.b16 %v97
    %v178 = vunpack.c.l.b16 %v98
    %v179 = vunpack.c.l.b16 %v99
    %v180 = vunpack.c.l.b16 %v100
    %v181 = vunpack.c.l.b16 %v101
    %v182 = vunpack.c.l.b16 %v102
    %v183 = vunpack.c.l.b16 %v103
    %v184 = vunpack.c.l.b16 %v104
    %v185 = vunpack.c.l.b16 %v105
    %v186 = vunpack.c.l.b16 %v106
    %v187 = vunpack.c.l.b16 %v107
    %v188 = vunpack.c.l.b16 %v108
    %v189 = vunpack.c.l.b16 %v109
    %v190 = vunpack.c.l.b16 %v110
    %v191 = vunpack.c.l.b16 %v111
    %v192 = vpack.c.b16 %v177, %v176
    %v193 = vpack.c.b16 %v179, %v178
    %v194 = vpack.c.b16 %v181, %v180
    %v195 = vpack.c.b16 %v183, %v182
    %v196 = vpack.c.b16 %v185, %v184
    %v197 = vpack.c.b16 %v187, %v186
    %v198 = vpack.c.b16 %v189, %v188
    %v199 = vpack.c.b16 %v191, %v190
    %208 = vmatpush.bf16.msra.mxu0 %v199
    %209 = vmatpush.bf16.msra.mxu0 %v198
    %210 = vmatpush.bf16.msra.mxu0 %v197
    %211 = vmatpush.bf16.msra.mxu0 %v196
    %212 = vmatpush.bf16.msra.mxu0 %v195
    %213 = vmatpush.bf16.msra.mxu0 %v194
    %214 = vmatpush.bf16.msra.mxu0 %v193
    %215 = vmatpush.bf16.msra.mxu0 %v192
    %216 = vmatmul.bf16.gmra.mxu0 %v144
    %v217 = vpop.f32.mrf.mxu0
    %v218 = vadd.f32 0.0, %v217
    %v219 = vpop.f32.mrf.mxu0
    %v220 = vadd.f32 0.0, %v219
    %221 = vmatmul.bf16.gmra.mxu0 %v145
    %v222 = vpop.f32.mrf.mxu0
    %v223 = vadd.f32 0.0, %v222
    %v224 = vpop.f32.mrf.mxu0
    %v225 = vadd.f32 0.0, %v224
    %226 = vmatmul.bf16.gmra.mxu0 %v146
    %v227 = vpop.f32.mrf.mxu0
    %v228 = vadd.f32 0.0, %v227
    %v229 = vpop.f32.mrf.mxu0
    %v230 = vadd.f32 0.0, %v229
    %231 = vmatmul.bf16.gmra.mxu0 %v147
    %v232 = vpop.f32.mrf.mxu0
    %v233 = vadd.f32 0.0, %v232
    %v234 = vpop.f32.mrf.mxu0
    %v235 = vadd.f32 0.0, %v234
    %236 = vmatmul.bf16.gmra.mxu0 %v148
    %v237 = vpop.f32.mrf.mxu0
    %v238 = vadd.f32 0.0, %v237
    %v239 = vpop.f32.mrf.mxu0
    %v240 = vadd.f32 0.0, %v239
    %241 = vmatmul.bf16.gmra.mxu0 %v149
    %v242 = vpop.f32.mrf.mxu0
    %v243 = vadd.f32 0.0, %v242
    %v244 = vpop.f32.mrf.mxu0
    %v245 = vadd.f32 0.0, %v244
    %246 = vmatmul.bf16.gmra.mxu0 %v150
    %v247 = vpop.f32.mrf.mxu0
    %v248 = vadd.f32 0.0, %v247
    %v249 = vpop.f32.mrf.mxu0
    %v250 = vadd.f32 0.0, %v249
    %251 = vmatmul.bf16.gmra.mxu0 %v151
    %v252 = vpop.f32.mrf.mxu0
    %v253 = vadd.f32 0.0, %v252
    %v254 = vpop.f32.mrf.mxu0
    %v255 = vadd.f32 0.0, %v254
    %256 = vdwg.mxu0
    %v257 = vadd.f32 %v64, %v218
    %v258 = vadd.f32 %v65, %v220
    %v259 = vadd.f32 %v66, %v223
    %v260 = vadd.f32 %v67, %v225
    %v261 = vadd.f32 %v68, %v228
    %v262 = vadd.f32 %v69, %v230
    %v263 = vadd.f32 %v70, %v233
    %v264 = vadd.f32 %v71, %v235
    %v265 = vadd.f32 %v72, %v238
    %v266 = vadd.f32 %v73, %v240
    %v267 = vadd.f32 %v74, %v243
    %v268 = vadd.f32 %v75, %v245
    %v269 = vadd.f32 %v76, %v248
    %v270 = vadd.f32 %v77, %v250
    %v271 = vadd.f32 %v78, %v253
    %v272 = vadd.f32 %v79, %v255
    %273 = vst [vmem:[#allocation2] sm:$0xff] %v257
    %274 = vst [vmem:[#allocation2 + $0x8] sm:$0xff] %v258
    %275 = vst [vmem:[#allocation2 + $0x10] sm:$0xff] %v259
    %276 = vst [vmem:[#allocation2 + $0x18] sm:$0xff] %v260
    %277 = vst [vmem:[#allocation2 + $0x20] sm:$0xff] %v261
    %278 = vst [vmem:[#allocation2 + $0x28] sm:$0xff] %v262
    %279 = vst [vmem:[#allocation2 + $0x30] sm:$0xff] %v263
    %280 = vst [vmem:[#allocation2 + $0x38] sm:$0xff] %v264
    %281 = vst [vmem:[#allocation2 + $0x40] sm:$0xff] %v265
    %282 = vst [vmem:[#allocation2 + $0x48] sm:$0xff] %v266
    %283 = vst [vmem:[#allocation2 + $0x50] sm:$0xff] %v267
    %284 = vst [vmem:[#allocation2 + $0x58] sm:$0xff] %v268
    %285 = vst [vmem:[#allocation2 + $0x60] sm:$0xff] %v269
    %286 = vst [vmem:[#allocation2 + $0x68] sm:$0xff] %v270
    %287 = vst [vmem:[#allocation2 + $0x70] sm:$0xff] %v271
    %288 = vst [vmem:[#allocation2 + $0x78] sm:$0xff] %v272
    // Predicated region
    $region22: #{tpu_custom_call.1} parent=1 // pred_check
      %p289 = pneg %p44
    $region23: #{tpu_custom_call.1} parent=1 // pred_check_branch
      %291 = sbr.rel (%p289) target = $region25
    $region24: #{tpu_custom_call.1} parent=1 // pred_region
      %v292 = vld [vmem:[#allocation2] sm:$0xff]
      %v293 = vld [vmem:[#allocation2 + $0x8] sm:$0xff]
      %v294 = vld [vmem:[#allocation2 + $0x10] sm:$0xff]
      %v295 = vld [vmem:[#allocation2 + $0x18] sm:$0xff]
      %v296 = vld [vmem:[#allocation2 + $0x20] sm:$0xff]
      %v297 = vld [vmem:[#allocation2 + $0x28] sm:$0xff]
      %v298 = vld [vmem:[#allocation2 + $0x30] sm:$0xff]
      %v299 = vld [vmem:[#allocation2 + $0x38] sm:$0xff]
      %v300 = vld [vmem:[#allocation2 + $0x40] sm:$0xff]
      %v301 = vld [vmem:[#allocation2 + $0x48] sm:$0xff]
      %v302 = vld [vmem:[#allocation2 + $0x50] sm:$0xff]
      %v303 = vld [vmem:[#allocation2 + $0x58] sm:$0xff]
      %v304 = vld [vmem:[#allocation2 + $0x60] sm:$0xff]
      %v305 = vld [vmem:[#allocation2 + $0x68] sm:$0xff]
      %v306 = vld [vmem:[#allocation2 + $0x70] sm:$0xff]
      %v307 = vld [vmem:[#allocation2 + $0x78] sm:$0xff]
      %v308 = vpack.c.bf16 %v292, %v292
      %v309 = vpack.c.bf16 %v293, %v293
      %v310 = vpack.c.bf16 %v294, %v294
      %v311 = vpack.c.bf16 %v295, %v295
      %v312 = vpack.c.bf16 %v296, %v296
      %v313 = vpack.c.bf16 %v297, %v297
      %v314 = vpack.c.bf16 %v298, %v298
      %v315 = vpack.c.bf16 %v299, %v299
      %v316 = vpack.c.bf16 %v300, %v300
      %v317 = vpack.c.bf16 %v301, %v301
      %v318 = vpack.c.bf16 %v302, %v302
      %v319 = vpack.c.bf16 %v303, %v303
      %v320 = vpack.c.bf16 %v304, %v304
      %v321 = vpack.c.bf16 %v305, %v305
      %v322 = vpack.c.bf16 %v306, %v306
      %v323 = vpack.c.bf16 %v307, %v307
      %324 = vst [vmem:[#allocation8] sm:$0xf] %v308
      %325 = vst [vmem:[#allocation8 + $0x4] sm:$0xf] %v309
      %326 = vst [vmem:[#allocation8 + $0x8] sm:$0xf] %v310
      %327 = vst [vmem:[#allocation8 + $0xc] sm:$0xf] %v311
      %328 = vst [vmem:[#allocation8 + $0x10] sm:$0xf] %v312
      %329 = vst [vmem:[#allocation8 + $0x14] sm:$0xf] %v313
      %330 = vst [vmem:[#allocation8 + $0x18] sm:$0xf] %v314
      %331 = vst [vmem:[#allocation8 + $0x1c] sm:$0xf] %v315
      %332 = vst [vmem:[#allocation8 + $0x20] sm:$0xf] %v316
      %333 = vst [vmem:[#allocation8 + $0x24] sm:$0xf] %v317
      %334 = vst [vmem:[#allocation8 + $0x28] sm:$0xf] %v318
      %335 = vst [vmem:[#allocation8 + $0x2c] sm:$0xf] %v319
      %336 = vst [vmem:[#allocation8 + $0x30] sm:$0xf] %v320
      %337 = vst [vmem:[#allocation8 + $0x34] sm:$0xf] %v321
      %338 = vst [vmem:[#allocation8 + $0x38] sm:$0xf] %v322
      %339 = vst [vmem:[#allocation8 + $0x3c] sm:$0xf] %v323
    $region25: #{tpu_custom_call.1} parent=1 // pred_fallthru
      _
    // Predicated region
    $region26: #{tpu_custom_call.1} parent=1 // pred_check
      _
    $region27: #{tpu_custom_call.1} parent=1 // pred_check_branch
      %341 = sbr.rel (0) target = $region29
    $region28: #{tpu_custom_call.1} parent=1 // pred_region
      %343 = vsyncadd [#allocation5], 0
      %s344 = sshll.u32 [#allocation8], 4
      %s345 = int_to_ptr.vmem [resolvable:$true] %s344
      %s346 = sshll.u32 %s2, 4
      %s347 = int_to_ptr.hbm [resolvable:$true] %s346
      %352 = dma.vmem_to_hbm [thread:$0]  %s345, 1024, %s347, [#allocation5], 64, 64, 4
    $region29: #{tpu_custom_call.1} parent=1 // pred_fallthru
      _
    // Predicated region
    $region30: #{tpu_custom_call.1} parent=1 // pred_check
      _
    $region31: #{tpu_custom_call.1} parent=1 // pred_check_branch
      %354 = sbr.rel (0) target = $region33
    $region32: #{tpu_custom_call.1} parent=1 // pred_region
      %356 = dma.done [#allocation5], 1024
    $region33: #{tpu_custom_call.1} parent=1 // pred_fallthru
      _
    %357 = vsyncpa [#allocation4], 1
    %358 = vsyncpa [#allocation7], 1
    %359 = vsyncpa [#allocation5], 1

</llo_original>
